<compile_context>
chip_gen: v7x
topology: tpu7x:2x2x1
jax: 0.10.0
libtpu: 0.0.40
codegen_flags: <defaults>
</compile_context>

<pallas_src>
import random

import jax
import jax.numpy as jnp
from jax.experimental import pallas as pl
from jax.experimental.pallas import tpu as pltpu


# ----------------------------------------------------------------------------
# Small tiling helpers
# ----------------------------------------------------------------------------
def _round_up(x, m):
    return ((x + m - 1) // m) * m


def _pick_row_tile(n, tmax):
    """Row tile that is a multiple of 8 (or == n), yielding >= 2 row blocks
    whenever possible so the 'parallel' row axis can shard across v7x's two
    TensorCores (no-op on v5e/v6e)."""
    if n < 16:
        return max(n, 1)
    if n <= tmax:
        return min(_round_up(pl.cdiv(n, 2), 8), tmax)
    return tmax


def _pick_col_tile(n, tmax):
    """Column tile: full extent when it fits, else tmax (a multiple of 128 so
    stores stay lane-dense and unmasked)."""
    return n if n <= tmax else tmax


# ----------------------------------------------------------------------------
# Kernel 1: masked residual reduction sums (sse, sum_y, sum_y2, n_valid)
# ----------------------------------------------------------------------------
def _make_residual_kernel(tr, blocks_per_part, total_rows, cols):
    def kernel(yh_ref, y_ref, out_ref):
        p = pl.program_id(0)
        i = pl.program_id(1)

        @pl.when(i == 0)
        def _():
            out_ref[...] = jnp.zeros_like(out_ref)

        # Stream the native dtype (bf16 halves HBM traffic); upcast after load.
        yh = yh_ref[...].astype(jnp.float32)
        y = y_ref[...].astype(jnp.float32)

        # Global row id; folds the ragged row tail (and the clamped duplicate
        # block when the block count is odd) into the NaN mask.  K1 is HBM
        # bound, so this VALU work rides in otherwise-idle slots.
        rid = (p * blocks_per_part + i) * tr + jax.lax.broadcasted_iota(
            jnp.int32, (tr, cols), 0)
        m = jnp.logical_and(jnp.logical_not(jnp.isnan(y)), rid < total_rows)

        r = yh - y
        sse = jnp.sum(jnp.where(m, r * r, 0.0), axis=0, keepdims=True)
        sy = jnp.sum(jnp.where(m, y, 0.0), axis=0, keepdims=True)
        sy2 = jnp.sum(jnp.where(m, y * y, 0.0), axis=0, keepdims=True)
        cnt = jnp.sum(m.astype(jnp.float32), axis=0, keepdims=True)

        # Single full-tile accumulate (one load + one store) instead of four
        # sub-8-sublane slice RMWs (helps v5e's single vector-store slot).
        upd = jnp.concatenate([sse, sy, sy2, cnt], axis=0)  # (4, cols)
        out_ref[...] += upd.reshape(1, 4, cols)

    return kernel


def _masked_residual_sums(y_hat, y, cols=512, max_rows_per_block=1024):
    n = y.size
    yh_flat = y_hat.reshape(-1)
    y_flat = y.reshape(-1)
    rem = n % cols
    if rem:
        # Tiny pad only when numel is not a multiple of `cols`; the NaN pad is
        # absorbed by the in-kernel NaN mask (no separate mask array).
        pad = cols - rem
        yh_flat = jnp.pad(yh_flat, (0, pad))
        y_flat = jnp.pad(y_flat, (0, pad), constant_values=jnp.nan)
    rows = yh_flat.size // cols
    yh2 = yh_flat.reshape(rows, cols)
    y2 = y_flat.reshape(rows, cols)

    tr = rows if rows <= max_rows_per_block else max_rows_per_block
    nb = pl.cdiv(rows, tr)
    if nb >= 2:
        # Leading "parallel" axis so v7x's two TCs each stream half the rows.
        p_parts = 2
        nbi = pl.cdiv(nb, p_parts)
        # Clamp OOB block indices when nb is odd; the duplicated block is
        # fully masked out in-kernel via rid >= total_rows.
        in_map = lambda p, i: (jnp.minimum(p * nbi + i, nb - 1), 0)
    else:
        p_parts = 1
        nbi = nb
        in_map = lambda p, i: (i, 0)

    out = pl.pallas_call(
        _make_residual_kernel(tr, nbi, rows, cols),
        out_shape=jax.ShapeDtypeStruct((p_parts, 4, cols), jnp.float32),
        grid_spec=pltpu.PrefetchScalarGridSpec(
            num_scalar_prefetch=0,
            grid=(p_parts, nbi),
            in_specs=[
                pl.BlockSpec((tr, cols), in_map),
                pl.BlockSpec((tr, cols), in_map),
            ],
            out_specs=pl.BlockSpec((1, 4, cols), lambda p, i: (p, 0, 0)),
        ),
        compiler_params=pltpu.CompilerParams(
            dimension_semantics=("parallel", "arbitrary")),
    )(yh2, y2)
    sums = jnp.sum(out, axis=(0, 2))
    return sums[0], sums[1], sums[2], sums[3]  # sse, sum_y, sum_y2, n_valid


# ----------------------------------------------------------------------------
# Kernel 2: tiled variogram pairwise loss sum
# ----------------------------------------------------------------------------
def _make_variogram_kernel(v_order, tr, tc, b, has_weight, needs_mask):
    def vpow(d):
        if v_order == 1:
            return jnp.abs(d)
        if v_order == 2:
            return d * d
        return jnp.abs(d) ** v_order

    def body(qyc, qhc, qyr, qhr, w, out_ref):
        i = pl.program_id(0)
        j = pl.program_id(1)

        @pl.when(j == 0)
        def _():
            out_ref[...] = jnp.zeros_like(out_ref)

        def tile_loss():
            lm = vpow(qyc - qyr) - vpow(qhc - qhr)
            lm = lm * lm
            if w is not None:
                lm = lm * w
            return lm

        def accum(lm):
            # Lane-dense (1, tc) per-lane partial: sublane reduce only, no
            # cross-lane XLU reduce, no iota/select, unmasked store.
            out_ref[...] += jnp.sum(lm, axis=0, keepdims=True).reshape(1, 1, tc)

        if not needs_mask:
            accum(tile_loss())
        else:
            full = jnp.logical_and((i + 1) * tr <= b, (j + 1) * tc <= b)

            @pl.when(full)
            def _():
                accum(tile_loss())

            @pl.when(jnp.logical_not(full))
            def _():
                rid = i * tr + jax.lax.broadcasted_iota(jnp.int32, (tr, 1), 0)
                cid = j * tc + jax.lax.broadcasted_iota(jnp.int32, (1, tc), 1)
                valid = jnp.logical_and(rid < b, cid < b)
                # Select (never multiply): edge blocks can hold garbage/NaN.
                accum(jnp.where(valid, tile_loss(), 0.0))

    if has_weight:
        def kernel(qyc_ref, qhc_ref, qyr_ref, qhr_ref, w_ref, out_ref):
            body(qyc_ref[...], qhc_ref[...], qyr_ref[...], qhr_ref[...],
                 w_ref[...], out_ref)
    else:
        def kernel(qyc_ref, qhc_ref, qyr_ref, qhr_ref, out_ref):
            body(qyc_ref[...], qhc_ref[...], qyr_ref[...], qhr_ref[...],
                 None, out_ref)
    return kernel


def _variogram_pairwise(qy, qh, weight, v_order, tr_max=512, tc_max=1024):
    b = qy.shape[0]
    qy = qy.astype(jnp.float32)
    qh = qh.astype(jnp.float32)
    tr = _pick_row_tile(b, tr_max)
    tc = _pick_col_tile(b, tc_max)
    gi = pl.cdiv(b, tr)
    gj = pl.cdiv(b, tc)
    needs_mask = (b % tr != 0) or (b % tc != 0)

    args = [qy.reshape(b, 1), qh.reshape(b, 1), qy.reshape(1, b), qh.reshape(1, b)]
    in_specs = [
        pl.BlockSpec((tr, 1), lambda i, j: (i, 0)),
        pl.BlockSpec((tr, 1), lambda i, j: (i, 0)),
        pl.BlockSpec((1, tc), lambda i, j: (0, j)),
        pl.BlockSpec((1, tc), lambda i, j: (0, j)),
    ]
    if weight is not None:
        args.append(weight.astype(jnp.float32))
        # (512, 1024) f32 weight blocks = 2 MiB per buffer (4 MiB double
        # buffered) — streams 2 MiB of weight per step, v5e-safe.
        in_specs.append(pl.BlockSpec((tr, tc), lambda i, j: (i, j)))

    out = pl.pallas_call(
        _make_variogram_kernel(v_order, tr, tc, b, weight is not None, needs_mask),
        out_shape=jax.ShapeDtypeStruct((gi, 1, tc), jnp.float32),
        grid_spec=pltpu.PrefetchScalarGridSpec(
            num_scalar_prefetch=0,
            grid=(gi, gj),
            in_specs=in_specs,
            out_specs=pl.BlockSpec((1, 1, tc), lambda i, j: (i, 0, 0)),
        ),
        compiler_params=pltpu.CompilerParams(
            dimension_semantics=("parallel", "arbitrary")),
    )(*args)
    # Reference uses .mean() over the full BxB matrix (diagonal included, both
    # orderings counted) => divide by b*b.
    return jnp.sum(out) / float(b * b)


# ----------------------------------------------------------------------------
# Kernel 3 (small-N fallback): FDC pairwise cross-term sum on sorted data
# ----------------------------------------------------------------------------
def _make_fdc_cross_kernel(tr, tc):
    def kernel(nv_ref, yc_ref, hr_ref, out_ref):
        i = pl.program_id(0)
        j = pl.program_id(1)

        @pl.when(j == 0)
        def _():
            out_ref[...] = jnp.zeros_like(out_ref)

        nv = nv_ref[0]

        # Skip blocks that lie fully past the valid (ascending-sorted) prefix.
        @pl.when(jnp.logical_and(i * tr < nv, j * tc < nv))
        def _():
            yc = yc_ref[...]   # (tr, 1)  ascending-sorted y block
            hr = hr_ref[...]   # (1, tc)  ascending-sorted y_hat block

            def accum(d):
                out_ref[...] += jnp.sum(d, axis=0, keepdims=True).reshape(1, 1, tc)

            full = jnp.logical_and((i + 1) * tr <= nv, (j + 1) * tc <= nv)

            # Unmasked fast path for interior blocks (VALU-bound kernel: the
            # iota/compare/select mask machinery is most of the per-element
            # cost, so interior blocks skip it entirely).
            @pl.when(full)
            def _():
                accum(jnp.abs(yc - hr))

            @pl.when(jnp.logical_not(full))
            def _():
                rid = i * tr + jax.lax.broadcasted_iota(jnp.int32, (tr, 1), 0)
                cid = j * tc + jax.lax.broadcasted_iota(jnp.int32, (1, tc), 1)
                valid = jnp.logical_and(rid < nv, cid < nv)
                accum(jnp.where(valid, jnp.abs(yc - hr), 0.0))

    return kernel


def _fdc_cross_sum_pallas(y_asc, h_asc, nv_i32, tr_max=512, tc_max=2048):
    n = y_asc.shape[0]
    tr = _pick_row_tile(n, tr_max)
    tc = _pick_col_tile(n, tc_max)
    gi = pl.cdiv(n, tr)
    gj = pl.cdiv(n, tc)

    out = pl.pallas_call(
        _make_fdc_cross_kernel(tr, tc),
        out_shape=jax.ShapeDtypeStruct((gi, 1, tc), jnp.float32),
        grid_spec=pltpu.PrefetchScalarGridSpec(
            num_scalar_prefetch=1,
            grid=(gi, gj),
            in_specs=[
                pl.BlockSpec((tr, 1), lambda i, j, nv: (i, 0)),
                pl.BlockSpec((1, tc), lambda i, j, nv: (0, j)),
            ],
            out_specs=pl.BlockSpec((1, 1, tc), lambda i, j, nv: (i, 0, 0)),
        ),
        compiler_params=pltpu.CompilerParams(
            dimension_semantics=("parallel", "arbitrary")),
    )(nv_i32, y_asc.reshape(n, 1), h_asc.reshape(1, n))
    return jnp.sum(out)


def _fdc_cross_sum_sorted(y_asc, h_asc, nv):
    """Exact O(N log N) cross-term sum_{i,j<nv} |y_i - h_j| on ascending-sorted
    data with invalid entries padded to +inf (valid prefix = [0, nv))."""
    # TODO(synk): searchsorted + prefix sums have no clean Pallas equivalent;
    # plain XLA used for the large-N path.
    n = y_asc.shape[0]
    idx = jnp.arange(n)
    h_zero = jnp.where(idx < nv, h_asc, 0.0)
    csum = jnp.concatenate([jnp.zeros((1,), jnp.float32), jnp.cumsum(h_zero)])
    total = csum[nv]
    c = jnp.searchsorted(h_asc, y_asc, side="right")   # +inf tail never counted
    c = jnp.minimum(c, nv)
    nvf = nv.astype(jnp.float32)
    contrib = y_asc * (2.0 * c.astype(jnp.float32) - nvf) - 2.0 * csum[c] + total
    return jnp.sum(jnp.where(idx < nv, contrib, 0.0))


def _fdc_within_sum_sorted(x_asc, nv):
    """Closed form: for ascending-sorted x with nv valid leading entries,
    sum_{i,j<nv} |x_i - x_j| = sum_{k<nv} 2*(2k - (nv-1)) * x_k  (O(N))."""
    n = x_asc.shape[0]
    k = jnp.arange(n)
    nvf = nv.astype(jnp.float32)
    w = 2.0 * (2.0 * k.astype(jnp.float32) - (nvf - 1.0))
    return jnp.sum(jnp.where(k < nv, w * x_asc, 0.0))


# ----------------------------------------------------------------------------
# Loss module (JAX/Pallas mirror of ngenLoss)
# ----------------------------------------------------------------------------
class Cfg:
    def __init__(self, variogram_weight, fdc_weight, residual_loss, residual_weight):
        self.variogram_weight = variogram_weight
        self.fdc_weight = fdc_weight
        self.residual_loss = residual_loss
        self.residual_weight = residual_weight


class NgenLossPallas:
    def __init__(self, cfg, distance_matrix=None, v_order=2):
        self.distance_matrix = distance_matrix
        self.variogram_weight = cfg.variogram_weight
        self.fdc_weight = cfg.fdc_weight
        self.residual_weight = cfg.residual_weight
        self.v_order = v_order
        self.quantile_bounds = (0.05, 0.95)
        # Above this size the O(N^2) pairwise Pallas cross kernel is replaced
        # by the exact O(N log N) sorted-prefix-sum formulation.
        self._fdc_pairwise_max_n = 4096
        rl = cfg.residual_loss.lower()
        assert rl in ("mse", "rmse", "nse"), f"Invalid residualloss: {rl}"
        self.residual_loss = rl

    def __call__(self, prediction, data):
        y_hat = prediction["y_hat"]
        y = data["y"]

        loss = jnp.float32(0.0)
        losses = {}
        if self.residual_weight > 0:
            residual = self._residual(y_hat, y)
            loss = loss + self.residual_weight * residual
            losses[f"{self.residual_loss}_loss"] = residual
        if self.variogram_weight > 0:
            vario = self._variogram(y_hat, y)
            loss = loss + self.variogram_weight * vario
            losses["variogram_loss"] = vario
        if self.fdc_weight > 0:
            fdc = self._fdc(y_hat, y)
            loss = loss + self.fdc_weight * fdc
            losses["fdc_loss"] = fdc
        losses["total_loss"] = loss
        return loss, losses

    def _residual(self, y_hat, y):
        sse, sum_y, sum_y2, nv = _masked_residual_sums(y_hat, y)
        safe_n = jnp.maximum(nv, 1.0)
        mse = sse / safe_n
        if self.residual_loss == "mse":
            val = mse
        elif self.residual_loss == "rmse":
            val = jnp.sqrt(mse)
        else:  # nse
            mean_y = sum_y / safe_n
            # unbiased=False population variance; clamp against cancellation.
            var_y = jnp.maximum(sum_y2 / safe_n - mean_y * mean_y, 0.0)
            denom = var_y * nv + 1e-6
            val = jnp.maximum(sse / denom, 0.0)  # == clamp(1 - nse, min=0)
        return jnp.where(nv > 0, val, jnp.float32(0.0))

    def _variogram(self, y_hat, y):
        # var_hyd_char(method='quantile', random_quantile=True): Python-level
        # random quantile per call like the reference (NOTE: under jax.jit it
        # would freeze as a trace-time constant).  The quantile is a plain
        # sorted-index lookup (int(q*T)), exactly as the reference; assumes
        # D == 1 like the reference's squeeze(-1).
        # TODO(synk): descending sort along T has no clean Pallas equivalent; jnp.sort used.
        T = y.shape[1]

        def quant(ts, q):
            srt = -jnp.sort(-ts.astype(jnp.float32), axis=1)  # descending
            idx = max(0, min(int(q * T), T - 1))
            return srt[:, idx, 0]  # [B]

        q_hat = random.uniform(*self.quantile_bounds)  # first draw: y_hat
        q_obs = random.uniform(*self.quantile_bounds)  # second draw: y
        qh = quant(y_hat, q_hat)
        qy = quant(y, q_obs)
        return _variogram_pairwise(qy, qh, self.distance_matrix, self.v_order)

    def _fdc(self, y_hat, y):
        mask = jnp.logical_not(jnp.isnan(y))
        nv = jnp.sum(mask, dtype=jnp.int32)
        # Ascending sort with invalid entries pushed to +inf so the valid
        # prefix is [0, nv) and the padding never pollutes prefix sums.
        # TODO(synk): full sort has no clean Pallas equivalent; jnp.sort used.
        y_asc = jnp.sort(jnp.where(mask, y, jnp.inf).reshape(-1).astype(jnp.float32))
        h_asc = jnp.sort(jnp.where(mask, y_hat, jnp.inf).reshape(-1).astype(jnp.float32))

        n = y_asc.shape[0]
        if n <= self._fdc_pairwise_max_n:
            cross = _fdc_cross_sum_pallas(y_asc, h_asc, nv.reshape(1))
        else:
            cross = _fdc_cross_sum_sorted(y_asc, h_asc, nv)

        # Within terms: exact O(N) closed form on sorted data (both paths).
        wy = _fdc_within_sum_sorted(y_asc, nv)
        wh = _fdc_within_sum_sorted(h_asc, nv)

        nvf = nv.astype(jnp.float32)
        n2 = jnp.maximum(nvf * nvf, 1.0)
        fdc = jnp.maximum((cross - 0.5 * (wy + wh)) / n2, 0.0)
        return jnp.where(nv > 0, fdc, jnp.float32(0.0))


# ----------------------------------------------------------------------------
if __name__ == "__main__":
    random.seed(0)  # deterministic random quantiles for the variogram term

    B, T, D = 8, 64, 1
    key = jax.random.PRNGKey(0)
    k1, k2, k3 = jax.random.split(key, 3)

    y = jax.random.normal(k1, (B, T, D), jnp.float32) * 2.0 + 5.0
    y_hat = y + 0.3 * jax.random.normal(k2, (B, T, D), jnp.float32)

    # Deterministic synthetic pairwise distance matrix (sites x sites).
    coords = jax.random.uniform(k3, (B, 2), jnp.float32)
    dist = jnp.sqrt(
        jnp.sum((coords[:, None, :] - coords[None, :, :]) ** 2, axis=-1)
    )

    cfg = Cfg(
        variogram_weight=0.3,
        fdc_weight=0.2,
        residual_loss="nse",
        residual_weight=1.0,
    )
    loss_fn = NgenLossPallas(cfg, distance_matrix=dist, v_order=2)

    loss, losses = loss_fn({"y_hat": y_hat}, {"y": y})
    jax.block_until_ready(loss)
    jax.block_until_ready(losses)
    print("KERNEL_OK")
</pallas_src>

<mosaic_0001>
module attributes {stable_mosaic.version = 11 : i64} {
  func.func @kernel(%arg0: i32, %arg1: i32, %arg2: memref<1x512xf32, #tpu.memory_space<vmem>>, %arg3: memref<1x512xf32, #tpu.memory_space<vmem>>, %arg4: memref<1x4x512xf32, #tpu.memory_space<vmem>>) attributes {dimension_semantics = [#tpu.dimension_semantics<parallel>, #tpu.dimension_semantics<arbitrary>], iteration_bounds = array<i64: 1, 1>, scalar_prefetch = 0 : i64, scratch_operands = 0 : i64, tpu.core_type = #tpu.core_type<tc>, window_params = [{transform_indices = @transform_0, window_bounds = array<i64: 1, 512>}, {transform_indices = @transform_1, window_bounds = array<i64: 1, 512>}, {transform_indices = @transform_2, window_bounds = array<i64: 1, 4, 512>}]} {
    %c0_i32 = arith.constant 0 : i32
    %0 = arith.cmpi eq, %arg1, %c0_i32 : i32
    %1 = arith.extui %0 : i1 to i32
    %c0_i32_0 = arith.constant 0 : i32
    %2 = arith.cmpi ne, %1, %c0_i32_0 : i32
    scf.if %2 {
      %cst_19 = arith.constant 0.000000e+00 : f32
      %40 = vector.broadcast %cst_19 : f32 to vector<1x4x512xf32>
      %c0_20 = arith.constant 0 : index
      %c0_21 = arith.constant 0 : index
      %c0_22 = arith.constant 0 : index
      %41 = vector.load %arg4[%c0_20, %c0_21, %c0_22] : memref<1x4x512xf32, #tpu.memory_space<vmem>>, vector<1x4x512xf32>
      tpu.vector_store %arg4[%c0_20, %c0_21, %c0_22], %40 {strides = array<i32>} : memref<1x4x512xf32, #tpu.memory_space<vmem>>, vector<1x4x512xf32>,
    } else {
    }
    %c0 = arith.constant 0 : index
    %c0_1 = arith.constant 0 : index
    %3 = vector.load %arg2[%c0, %c0_1] : memref<1x512xf32, #tpu.memory_space<vmem>>, vector<1x512xf32>
    %c0_2 = arith.constant 0 : index
    %c0_3 = arith.constant 0 : index
    %4 = vector.load %arg3[%c0_2, %c0_3] : memref<1x512xf32, #tpu.memory_space<vmem>>, vector<1x512xf32>
    %c1_i32 = arith.constant 1 : i32
    %5 = arith.muli %arg0, %c1_i32 : i32
    %6 = arith.addi %5, %arg1 : i32
    %c1_i32_4 = arith.constant 1 : i32
    %7 = arith.muli %6, %c1_i32_4 : i32
    %8 = tpu.iota {dimensions = array<i32: 0>} : vector<1x512xi32>
    %9 = vector.broadcast %7 : i32 to vector<1x512xi32>
    %10 = arith.addi %9, %8 : vector<1x512xi32>
    %11 = arith.cmpf one, %4, %4 : vector<1x512xf32>
    %cst = arith.constant dense<true> : vector<1x512xi1>
    %12 = arith.xori %11, %cst : vector<1x512xi1>
    %c1_i32_5 = arith.constant 1 : i32
    %13 = vector.broadcast %c1_i32_5 : i32 to vector<1x512xi32>
    %14 = arith.cmpi slt, %10, %13 : vector<1x512xi32>
    %15 = arith.andi %12, %14 : vector<1x512xi1>
    %16 = arith.subf %3, %4 : vector<1x512xf32>
    %17 = arith.mulf %16, %16 : vector<1x512xf32>
    %cst_6 = arith.constant 0.000000e+00 : f32
    %18 = vector.broadcast %cst_6 : f32 to vector<1x512xf32>
    %19 = arith.select %15, %17, %18 : vector<1x512xi1>, vector<1x512xf32>
    %cst_7 = arith.constant dense<0.000000e+00> : vector<512xf32>
    %20 = vector.multi_reduction <add>, %19, %cst_7 [0] : vector<1x512xf32> to vector<512xf32>
    %21 = vector.shape_cast %20 : vector<512xf32> to vector<1x512xf32>
    %cst_8 = arith.constant 0.000000e+00 : f32
    %22 = vector.broadcast %cst_8 : f32 to vector<1x512xf32>
    %23 = arith.select %15, %4, %22 : vector<1x512xi1>, vector<1x512xf32>
    %cst_9 = arith.constant dense<0.000000e+00> : vector<512xf32>
    %24 = vector.multi_reduction <add>, %23, %cst_9 [0] : vector<1x512xf32> to vector<512xf32>
    %25 = vector.shape_cast %24 : vector<512xf32> to vector<1x512xf32>
    %26 = arith.mulf %4, %4 : vector<1x512xf32>
    %cst_10 = arith.constant 0.000000e+00 : f32
    %27 = vector.broadcast %cst_10 : f32 to vector<1x512xf32>
    %28 = arith.select %15, %26, %27 : vector<1x512xi1>, vector<1x512xf32>
    %cst_11 = arith.constant dense<0.000000e+00> : vector<512xf32>
    %29 = vector.multi_reduction <add>, %28, %cst_11 [0] : vector<1x512xf32> to vector<512xf32>
    %30 = vector.shape_cast %29 : vector<512xf32> to vector<1x512xf32>
    %31 = arith.extui %15 : vector<1x512xi1> to vector<1x512xi32>
    %32 = arith.sitofp %31 : vector<1x512xi32> to vector<1x512xf32>
    %cst_12 = arith.constant dense<0.000000e+00> : vector<512xf32>
    %33 = vector.multi_reduction <add>, %32, %cst_12 [0] : vector<1x512xf32> to vector<512xf32>
    %34 = vector.shape_cast %33 : vector<512xf32> to vector<1x512xf32>
    %35 = tpu.concatenate %21, %25, %30, %34 in 0 : vector<1x512xf32>, vector<1x512xf32>, vector<1x512xf32>, vector<1x512xf32> -> vector<4x512xf32>
    %c0_13 = arith.constant 0 : index
    %c0_14 = arith.constant 0 : index
    %c0_15 = arith.constant 0 : index
    %36 = vector.load %arg4[%c0_13, %c0_14, %c0_15] : memref<1x4x512xf32, #tpu.memory_space<vmem>>, vector<1x4x512xf32>
    %37 = vector.shape_cast %35 : vector<4x512xf32> to vector<1x4x512xf32>
    %38 = arith.addf %36, %37 : vector<1x4x512xf32>
    %c0_16 = arith.constant 0 : index
    %c0_17 = arith.constant 0 : index
    %c0_18 = arith.constant 0 : index
    %39 = vector.load %arg4[%c0_16, %c0_17, %c0_18] : memref<1x4x512xf32, #tpu.memory_space<vmem>>, vector<1x4x512xf32>
    tpu.vector_store %arg4[%c0_16, %c0_17, %c0_18], %38 {strides = array<i32>} : memref<1x4x512xf32, #tpu.memory_space<vmem>>, vector<1x4x512xf32>,
    return
  }
  func.func @transform_0(%arg0: i32, %arg1: i32) -> (i32, i32) {
    %c0_i32 = arith.constant 0 : i32
    %c0_i32_0 = arith.constant 0 : i32
    return %arg1, %c0_i32 : i32, i32
  }
  func.func @transform_1(%arg0: i32, %arg1: i32) -> (i32, i32) {
    %c0_i32 = arith.constant 0 : i32
    %c0_i32_0 = arith.constant 0 : i32
    return %arg1, %c0_i32 : i32, i32
  }
  func.func @transform_2(%arg0: i32, %arg1: i32) -> (i32, i32, i32) {
    %c0_i32 = arith.constant 0 : i32
    %c0_i32_0 = arith.constant 0 : i32
    %c0_i32_1 = arith.constant 0 : i32
    return %arg0, %c0_i32, %c0_i32_0 : i32, i32, i32
  }
}

</mosaic_0001>

<llo_original>
// kernel: tpu_custom_call.1
$region0: #{tpu_custom_call.1}
  #allocation0 [shape = 'u32[]', space=smem, size = 0x4, offset = 0x4, fixed_abs, tag = 'smem constant byte address 0x4 - core index']
  #allocation1 [shape = 'u32[144,128]{1,0:T(1,128)}', space=vmem, size = 0x12000, scoped, tag = 'internal scratch']
  %s0 = inlined_call_operand.hbm [shape: f32[1,512], index: 0, kind: input, shape index: {}]
  %s1 = inlined_call_operand.hbm [shape: f32[1,512], index: 1, kind: input, shape index: {}]
  %s2 = inlined_call_operand.hbm [shape: f32[1,4,512], index: 2, kind: output, shape index: {}]
  %s3 = sld [smem:[#allocation0]]
  $region30: #{tpu_custom_call.1} parent=0
    _
  %s5 = ssub.s32 1, %s3
  %s6 = scalar_select 0, %s5, %s3
  $region1: #{tpu_custom_call.1} parent=0
    #allocation2 [shape = 'u8[2048]{0}', space=vmem, size = 0x800, scoped, tag = 'input window, operand 0, single buffered']
    #allocation3 [shape = 's32[1]{0}', space=sflag, size = 0x4, scoped, tag = 'scoped memory for tpu_custom_call.1']
    #allocation4 [shape = 's32[1]{0}', space=sflag, size = 0x4, scoped, tag = 'scoped memory for tpu_custom_call.1']
    #allocation5 [shape = 'u8[2048]{0}', space=vmem, size = 0x800, scoped, tag = 'input window, operand 1, single buffered']
    #allocation6 [shape = 's32[1]{0}', space=sflag, size = 0x4, scoped, tag = 'scoped memory for tpu_custom_call.1']
    #allocation7 [shape = 'u8[8192]{0}', space=vmem, size = 0x2000, scoped, tag = 'output window, operand 0, single buffered']
    %7 = vsyncpa [#allocation3], 0
    %8 = vsyncpa [#allocation6], 0
    %9 = vsyncpa [#allocation4], 0
    // Predicated region
    $region2: #{tpu_custom_call.1} parent=1 // pred_check
      _
    $region3: #{tpu_custom_call.1} parent=1 // pred_check_branch
      %11 = sbr.rel (0) target = $region5
    $region4: #{tpu_custom_call.1} parent=1 // pred_region
      %s13 = ssub.s32 64, 64
      %14 = vsyncadd [#allocation3], %s13
      %s16 = sshll.u32 [#allocation2], 4
      %s17 = int_to_ptr.vmem [resolvable:$true] %s16
      %19 = dma.hbm_to_vmem [thread:$0]  %s0, 64, %s17, [#allocation3]
    $region5: #{tpu_custom_call.1} parent=1 // pred_fallthru
      _
    // Predicated region
    $region6: #{tpu_custom_call.1} parent=1 // pred_check
      _
    $region7: #{tpu_custom_call.1} parent=1 // pred_check_branch
      %21 = sbr.rel (0) target = $region9
    $region8: #{tpu_custom_call.1} parent=1 // pred_region
      %s23 = ssub.s32 64, 64
      %24 = vsyncadd [#allocation6], %s23
      %s26 = sshll.u32 [#allocation5], 4
      %s27 = int_to_ptr.vmem [resolvable:$true] %s26
      %29 = dma.hbm_to_vmem [thread:$0]  %s1, 64, %s27, [#allocation6]
    $region9: #{tpu_custom_call.1} parent=1 // pred_fallthru
      _
    // Predicated region
    $region10: #{tpu_custom_call.1} parent=1 // pred_check
      _
    $region11: #{tpu_custom_call.1} parent=1 // pred_check_branch
      %31 = sbr.rel (0) target = $region13
    $region12: #{tpu_custom_call.1} parent=1 // pred_region
      %32 = dma.done [#allocation3], 64
    $region13: #{tpu_custom_call.1} parent=1 // pred_fallthru
      _
    // Predicated region
    $region14: #{tpu_custom_call.1} parent=1 // pred_check
      _
    $region15: #{tpu_custom_call.1} parent=1 // pred_check_branch
      %34 = sbr.rel (0) target = $region17
    $region16: #{tpu_custom_call.1} parent=1 // pred_region
      %35 = dma.done [#allocation6], 64
    $region17: #{tpu_custom_call.1} parent=1 // pred_fallthru
      _
    %p36 = scmp.eq.s32.totalorder 0, 0
    // Predicated region
    $region18: #{tpu_custom_call.1} parent=1 // pred_check
      %p37 = pneg %p36
    $region19: #{tpu_custom_call.1} parent=1 // pred_check_branch
      %39 = sbr.rel (%p37) target = $region21
    $region20: #{tpu_custom_call.1} parent=1 // pred_region
      %40 = vst [vmem:[#allocation7] sm:$0xff] 0.0
      %41 = vst [vmem:[#allocation7 + $0x8] sm:$0xff] 0.0
    $region21: #{tpu_custom_call.1} parent=1 // pred_fallthru
      _
    %v42 = vld [vmem:[#allocation2] sm:$0xf]
    %v43 = vld [vmem:[#allocation5] sm:$0xf]
    %s44 = sadd.s32 0, 0
    %v45 = vlaneseq
    %v46 = vshrl.u32 %v45, 7
    %v47 = vstv %s44
    %v48 = vadd.s32 %v47, %v46
    %vm49 = vcmp.ne.f32.partialorder %v43, %v43
    %vm50 = vmxor %vm49, 1
    %vm51 = vcmp.lt.s32.totalorder %v48, 1
    %v52 = vsel %vm51, 1, 0
    %v53 = vlaneseq
    %v54 = vshrl.u32 %v53, 7
    %v55 = vsub.s32 0, %v54
    %v56 = vrot.slane %v52, %v55
    %vm57 = vcmp.ne.s32.totalorder %v56, 0
    %vm58 = vmand %vm50, %vm57
    %v59 = vsub.f32 %v42, %v43
    %v60 = vmul.f32 %v59, %v59
    %v61 = vsel %vm58, %v60, 0.0
    %v62 = vadd.f32 %v61, 0.0
    %v63 = vsel %vm58, %v43, 0.0
    %v64 = vadd.f32 %v63, 0.0
    %v65 = vmul.f32 %v43, %v43
    %v66 = vsel %vm58, %v65, 0.0
    %v67 = vadd.f32 %v66, 0.0
    %v68 = vsel %vm58, 1, 0
    %v69 = vcvt.s32.f32 %v68
    %v70 = vadd.f32 %v69, 0.0
    %v72 = vlaneseq
    %v73 = vshrl.u32 %v72, 7
    %v74 = vsub.s32 0, %v73
    %v75 = vrot.slane %v62, %v74
    %v76 = vlaneseq
    %v77 = vshrl.u32 %v76, 7
    %v78 = vsub.s32 1, %v77
    %v79 = vrot.slane %v62, %v78
    %v80 = vlaneseq
    %v81 = vshrl.u32 %v80, 7
    %v82 = vsub.s32 2, %v81
    %v83 = vrot.slane %v62, %v82
    %v84 = vlaneseq
    %v85 = vshrl.u32 %v84, 7
    %v86 = vsub.s32 3, %v85
    %v87 = vrot.slane %v62, %v86
    %v93 = vlaneseq
    %v94 = vshrl.u32 %v93, 7
    %v95 = vsub.s32 0, %v94
    %v96 = vrot.slane %v64, %v95
    %v97 = vlaneseq
    %v98 = vshrl.u32 %v97, 7
    %v99 = vsub.s32 1, %v98
    %v100 = vrot.slane %v64, %v99
    %v101 = vlaneseq
    %v102 = vshrl.u32 %v101, 7
    %v103 = vsub.s32 2, %v102
    %v104 = vrot.slane %v64, %v103
    %v105 = vlaneseq
    %v106 = vshrl.u32 %v105, 7
    %v107 = vsub.s32 3, %v106
    %v108 = vrot.slane %v64, %v107
    %v114 = vlaneseq
    %v115 = vshrl.u32 %v114, 7
    %v116 = vsub.s32 0, %v115
    %v117 = vrot.slane %v67, %v116
    %v118 = vlaneseq
    %v119 = vshrl.u32 %v118, 7
    %v120 = vsub.s32 1, %v119
    %v121 = vrot.slane %v67, %v120
    %v122 = vlaneseq
    %v123 = vshrl.u32 %v122, 7
    %v124 = vsub.s32 2, %v123
    %v125 = vrot.slane %v67, %v124
    %v126 = vlaneseq
    %v127 = vshrl.u32 %v126, 7
    %v128 = vsub.s32 3, %v127
    %v129 = vrot.slane %v67, %v128
    %v135 = vlaneseq
    %v136 = vshrl.u32 %v135, 7
    %v137 = vsub.s32 0, %v136
    %v138 = vrot.slane %v70, %v137
    %v139 = vlaneseq
    %v140 = vshrl.u32 %v139, 7
    %v141 = vsub.s32 1, %v140
    %v142 = vrot.slane %v70, %v141
    %v143 = vlaneseq
    %v144 = vshrl.u32 %v143, 7
    %v145 = vsub.s32 2, %v144
    %v146 = vrot.slane %v70, %v145
    %v147 = vlaneseq
    %v148 = vshrl.u32 %v147, 7
    %v149 = vsub.s32 3, %v148
    %v150 = vrot.slane %v70, %v149
    %vm155 = vcmask 1040384
    %v156 = vsel %vm155, %v75, %v96
    %v157 = vsel %vm155, %v79, %v100
    %v158 = vsel %vm155, %v83, %v104
    %v159 = vsel %vm155, %v87, %v108
    %vm160 = vcmask 1041408
    %v161 = vsel %vm160, %v156, %v117
    %v162 = vsel %vm160, %v157, %v121
    %v163 = vsel %vm160, %v158, %v125
    %v164 = vsel %vm160, %v159, %v129
    %vm165 = vcmask 1042432
    %v166 = vsel %vm165, %v161, %v138
    %v167 = vsel %vm165, %v162, %v142
    %v168 = vsel %vm165, %v163, %v146
    %v169 = vsel %vm165, %v164, %v150
    %v170 = vld [vmem:[#allocation7] sm:$0xff]
    %v171 = vld [vmem:[#allocation7 + $0x8] sm:$0xff]
    %v176 = vcombine.low %v166, %v167
    %v177 = vcombine.low %v168, %v169
    %v180 = vadd.f32 %v170, %v176
    %v181 = vadd.f32 %v171, %v177
    %182 = vst [vmem:[#allocation7] sm:$0xff] %v180
    %183 = vst [vmem:[#allocation7 + $0x8] sm:$0xff] %v181
    // Predicated region
    $region22: #{tpu_custom_call.1} parent=1 // pred_check
      _
    $region23: #{tpu_custom_call.1} parent=1 // pred_check_branch
      %185 = sbr.rel (0) target = $region25
    $region24: #{tpu_custom_call.1} parent=1 // pred_region
      %s187 = ssub.s32 256, 256
      %188 = vsyncadd [#allocation4], %s187
      %s190 = sshll.u32 [#allocation7], 4
      %s191 = int_to_ptr.vmem [resolvable:$true] %s190
      %193 = dma.vmem_to_hbm [thread:$0]  %s191, 256, %s2, [#allocation4]
    $region25: #{tpu_custom_call.1} parent=1 // pred_fallthru
      _
    // Predicated region
    $region26: #{tpu_custom_call.1} parent=1 // pred_check
      _
    $region27: #{tpu_custom_call.1} parent=1 // pred_check_branch
      %195 = sbr.rel (0) target = $region29
    $region28: #{tpu_custom_call.1} parent=1 // pred_region
      %196 = dma.done [#allocation4], 256
    $region29: #{tpu_custom_call.1} parent=1 // pred_fallthru
      _
    %197 = vsyncpa [#allocation3], 1
    %198 = vsyncpa [#allocation6], 1
    %199 = vsyncpa [#allocation4], 1

</llo_original>
